<compile_context>
chip_gen: v6e
topology: v6e:2x2x1
jax: 0.10.0
libtpu: 0.0.40
codegen_flags: <defaults>
</compile_context>

<pallas_src>
import numpy as np

import jax
import jax.numpy as jnp
from jax.experimental import pallas as pl
from jax.experimental.pallas import tpu as pltpu

COMPUTE_DTYPE = jnp.bfloat16          # MXU operand / intermediate activation dtype


def _tpu_budgets():
    """Per-generation scoped-VMEM limit + IGDN lane tile."""
    vmem_cap = 64 * 1024 * 1024
    try:
        info = pltpu.get_tpu_info()
        vmem_cap = int(getattr(info, "vmem_capacity_bytes", vmem_cap))
    except Exception:
        pass
    if vmem_cap >= 128 * 1024 * 1024:          # v5e / v6e
        return 96 * 1024 * 1024, 2048
    return 48 * 1024 * 1024, 1024              # v7x (64 MiB physical VMEM)


VMEM_LIMIT, LANE_TILE = _tpu_budgets()


# ----------------------------------------------------------------------------
# Pallas kernels
# ----------------------------------------------------------------------------
def _make_conv_kernel(KH, KW, W, Np, pad, has_skip):
    """Stride-1 'same' conv: per-tap MXU accumulation over a flat, margin-padded input."""
    def kernel(*refs):
        if has_skip:
            x_ref, w_ref, m_ref, b_ref, s_ref, o_ref, acc_ref = refs
        else:
            x_ref, w_ref, m_ref, b_ref, o_ref, acc_ref = refs
            s_ref = None
        acc_ref[...] = jnp.zeros(acc_ref.shape, jnp.float32)
        for dh in range(KH):
            for dw in range(KW):
                k = dh * KW + dw
                start = dh * W + dw
                tap = x_ref[:, start:start + Np]            # (Cin, Np) bf16, contiguous
                if dh != pad or dw != pad:                  # image-border zero padding
                    tap = tap * m_ref[k:k + 1, :]
                acc_ref[...] += jnp.dot(w_ref[k], tap,
                                        preferred_element_type=jnp.float32)
        res = acc_ref[...] + b_ref[...]
        if has_skip:
            res = res + s_ref[...].astype(jnp.float32)      # fused branch sum
        o_ref[...] = res.astype(o_ref.dtype)
    return kernel


def _igdn_kernel(x_ref, g_ref, b_ref, o_ref):
    # inverse GDN:  y_i = x_i * sqrt(beta_i + sum_j gamma[i, j] * x_j^2)
    x = x_ref[...]                                          # (C, T) bf16
    norm = jnp.dot(g_ref[...], x * x, preferred_element_type=jnp.float32) + b_ref[...]
    o_ref[...] = (x.astype(jnp.float32) * jnp.sqrt(norm)).astype(o_ref.dtype)


# ----------------------------------------------------------------------------
# Pallas wrappers
# ----------------------------------------------------------------------------
def _tap_masks(H, W, KH, KW, pad):
    """0/1 mask per tap (flat output positions) implementing zero image padding."""
    i = np.arange(H)[:, None]
    j = np.arange(W)[None, :]
    m = np.zeros((KH * KW, H * W), np.float32)
    for dh in range(KH):
        for dw in range(KW):
            valid = ((i + dh - pad >= 0) & (i + dh - pad < H) &
                     (j + dw - pad >= 0) & (j + dw - pad < W))
            m[dh * KW + dw] = valid.astype(np.float32).reshape(-1)
    return m


def conv_taps(x, w_taps, bias, ksize, pad, out_dtype, skip=None):
    """out(B, Cout, H, W) = stride-1 'same' conv of x(B, C, H, W) with tap weights
    w_taps(ksize*ksize, Cout, C), fused bias (+ optional skip) epilogue."""
    B, C, H, W = x.shape
    KK, Cout, _ = w_taps.shape
    Np = H * W
    margin = pad * W + pad
    Lp = Np + 2 * margin
    xp = jnp.pad(x.reshape(B, C, Np), ((0, 0), (0, 0), (margin, margin)))
    masks = jnp.asarray(_tap_masks(H, W, ksize, ksize, pad), COMPUTE_DTYPE)

    operands = [xp, w_taps, masks, bias]
    in_specs = [
        pl.BlockSpec((None, C, Lp), lambda b: (b, 0, 0)),
        # Constant-index operands: index_map is constant so Mosaic can hoist the DMA.
        # TODO(synk): pipeline_mode=pl.Buffered(1) for w/masks/bias once verified safe.
        pl.BlockSpec((KK, Cout, C), lambda b: (0, 0, 0)),
        pl.BlockSpec((KK, Np), lambda b: (0, 0)),
        pl.BlockSpec((Cout, 1), lambda b: (0, 0)),
    ]
    bytes_accessed = (xp.size * xp.dtype.itemsize + w_taps.size * 2 + masks.size * 2
                      + Cout * 4 + B * Cout * Np * np.dtype(out_dtype).itemsize)
    if skip is not None:
        sk = skip.reshape(B, Cout, Np)
        operands.append(sk)
        in_specs.append(pl.BlockSpec((None, Cout, Np), lambda b: (b, 0, 0)))
        bytes_accessed += sk.size * sk.dtype.itemsize
    # input_output_aliases for the skip operand is intentionally NOT used: both skip
    # buffers (hh_phase / conv_ll) have another live consumer, so XLA would insert a
    # defensive copy and negate the benefit.
    out = pl.pallas_call(
        _make_conv_kernel(ksize, ksize, W, Np, pad, skip is not None),
        out_shape=jax.ShapeDtypeStruct((B, Cout, Np), out_dtype),
        grid=(B,),
        in_specs=in_specs,
        out_specs=pl.BlockSpec((None, Cout, Np), lambda b: (b, 0, 0)),
        scratch_shapes=[pltpu.VMEM((Cout, Np), jnp.float32)],
        compiler_params=pltpu.CompilerParams(
            dimension_semantics=("parallel",),     # also shards across v7x's 2 TCs
            vmem_limit_bytes=VMEM_LIMIT),
        cost_estimate=pl.CostEstimate(
            flops=int(2 * B * Cout * C * KK * Np),
            transcendentals=0,
            bytes_accessed=int(bytes_accessed)),
    )(*operands)
    return out.reshape(B, Cout, H, W)


def _pick_tile(n, max_tile):
    if n <= max_tile:
        return n
    t = (max_tile // 128) * 128
    while t >= 128:
        if n % t == 0:
            return t
        t -= 128
    return n


def igdn(x, gamma, beta):
    """Inverse GDN on an NCHW (or N,C,*) activation; bf16 in/out, f32 internal math."""
    shape = x.shape
    B, C = shape[0], shape[1]
    N = 1
    for d in shape[2:]:
        N *= d
    xf = x.reshape(B, C, N)
    tile = _pick_tile(N, LANE_TILE)
    out = pl.pallas_call(
        _igdn_kernel,
        out_shape=jax.ShapeDtypeStruct((B, C, N), x.dtype),
        grid=(B, N // tile),
        in_specs=[
            pl.BlockSpec((None, C, tile), lambda b, i: (b, 0, i)),
            pl.BlockSpec((C, C), lambda b, i: (0, 0)),
            pl.BlockSpec((C, 1), lambda b, i: (0, 0)),
        ],
        out_specs=pl.BlockSpec((None, C, tile), lambda b, i: (b, 0, i)),
        compiler_params=pltpu.CompilerParams(
            dimension_semantics=("parallel", "parallel"),
            vmem_limit_bytes=VMEM_LIMIT),
        cost_estimate=pl.CostEstimate(
            flops=int(2 * B * C * C * N + 3 * B * C * N),
            transcendentals=int(B * C * N),
            bytes_accessed=int(2 * 2 * B * C * N + 2 * C * C + 4 * C)),
    )(xf, gamma, beta)
    return out.reshape(shape)


def igdn_phase(x_phase, gamma, beta, groups=4):
    """IGDN applied independently to each polyphase plane (IGDN is pointwise in pixels)."""
    B, GC, H, W = x_phase.shape
    C = GC // groups
    y = igdn(x_phase.reshape(B * groups, C, H, W), gamma, beta)
    return y.reshape(B, GC, H, W)


def depth_to_space(phase, cout):
    """(B, 4*cout, H, W) polyphase planes [(rh, rw, co)-major] -> (B, cout, 2H, 2W)."""
    B, _, H, W = phase.shape
    t = phase.reshape(B, 2, 2, cout, H, W)
    t = jnp.transpose(t, (0, 3, 4, 1, 5, 2))
    return t.reshape(B, cout, 2 * H, 2 * W)


# ----------------------------------------------------------------------------
# Weight preparation: PyTorch layouts -> tap matrices (runs once, numpy)
# ----------------------------------------------------------------------------
def _prep_deconv_k4s2(wt, bias):
    """ConvTranspose2d(Ci,Co,4,s=2,p=1) -> 3x3 tap weights producing 4*Co phase planes."""
    wt = np.asarray(wt, np.float32)                       # (Ci, Co, 4, 4)
    Ci, Co = wt.shape[0], wt.shape[1]
    W = np.zeros((3, 3, 2, 2, Co, Ci), np.float32)
    for rh in range(2):
        for rw in range(2):
            for dh in range(rh, rh + 2):
                for dw in range(rw, rw + 2):
                    W[dh, dw, rh, rw] = wt[:, :, rh + 3 - 2 * dh, rw + 3 - 2 * dw].T
    w_taps = jnp.asarray(W.reshape(9, 4 * Co, Ci), COMPUTE_DTYPE)
    b = jnp.asarray(np.tile(np.asarray(bias, np.float32), 4).reshape(4 * Co, 1))
    return w_taps, b


def _prep_deconv_k5s1(wt, bias):
    """ConvTranspose2d(Ci,Co,5,s=1,p=2) == flipped 5x5 conv, pad 2 -> 25 tap weights."""
    wt = np.asarray(wt, np.float32)                       # (Ci, Co, 5, 5)
    Ci, Co = wt.shape[0], wt.shape[1]
    wf = wt[:, :, ::-1, ::-1]
    w_taps = jnp.asarray(np.transpose(wf, (2, 3, 1, 0)).reshape(25, Co, Ci), COMPUTE_DTYPE)
    return w_taps, jnp.asarray(np.asarray(bias, np.float32).reshape(Co, 1))


def _prep_conv_hl_phase(w, bias):
    """Conv2d(Cin,Co,4,s=2,p=1) applied to a 2x-upsampled input, rewritten as a 3x3
    stride-1 conv over the input's 4 polyphase planes ((r, s, c)-major channels)."""
    w = np.asarray(w, np.float32)                         # (Co, Cin, 4, 4)
    Co, Cin = w.shape[0], w.shape[1]
    Wp = np.zeros((3, 3, Co, 2, 2, Cin), np.float32)
    for r in range(2):
        for s in range(2):
            for du in range(3):
                kh = 2 * du - 1 + r
                if not 0 <= kh < 4:
                    continue
                for dv in range(3):
                    kw = 2 * dv - 1 + s
                    if not 0 <= kw < 4:
                        continue
                    Wp[du, dv, :, r, s, :] = w[:, :, kh, kw]
    w_taps = jnp.asarray(Wp.reshape(9, Co, 4 * Cin), COMPUTE_DTYPE)
    return w_taps, jnp.asarray(np.asarray(bias, np.float32).reshape(Co, 1))


# ----------------------------------------------------------------------------
# GOTConv layers (activations NCHW, bf16)
# ----------------------------------------------------------------------------
def got_conv_s2(p, h, l):
    """Non-endpoint GOTConv (block_stride=2, inverse GDN)."""
    Co = p["HL_b"].shape[0]

    # convHH = IGDN -> ConvTranspose2d(k4,s2,p1); kept as 4 polyphase planes.
    h_n = igdn(h, p["HH_gamma"], p["HH_beta"])
    hh_phase = conv_taps(h_n, p["HH_w"], p["HH_b"], 3, 1, COMPUTE_DTYPE)      # (B,4Co,Hh,Wh)

    # convLL = IGDN -> ConvTranspose2d(k4,s2,p1)
    l_n = igdn(l, p["LL_gamma"], p["LL_beta"])
    ll_phase = conv_taps(l_n, p["LL_w"], p["LL_b"], 3, 1, COMPUTE_DTYPE)      # (B,4Co,Hl,Wl)
    conv_ll = depth_to_space(ll_phase, Co)                                    # (B,Co,Hh,Wh)

    # convLH(conv_ll); high-branch sum conv_hh + conv_lh fused as a phase-level skip add
    lh_n = igdn(conv_ll, p["LH_gamma"], p["LH_beta"])
    outh_phase = conv_taps(lh_n, p["LH_w"], p["LH_b"], 3, 1, COMPUTE_DTYPE, skip=hh_phase)
    outputs_h = depth_to_space(outh_phase, Co)                                # (B,Co,2Hh,2Wh)

    # convHL(conv_hh): IGDN applied per polyphase plane and the strided 4x4 conv rewritten
    # as a 3x3 conv over the phase planes -> conv_hh never materialised at full resolution.
    hl_n = igdn_phase(hh_phase, p["HL_gamma"], p["HL_beta"], groups=4)
    outputs_l = conv_taps(hl_n, p["HL_w"], p["HL_b"], 3, 1, COMPUTE_DTYPE, skip=conv_ll)
    return outputs_h, outputs_l


def got_conv_endpoint(p, h, l):
    """Endpoint GOTConv (block_stride=1, no IGDN, no HL branch)."""
    Co = p["LL_b"].shape[0]
    conv_ll = conv_taps(l, p["LL_w"], p["LL_b"], 5, 2, COMPUTE_DTYPE)         # (B,Co,Hl,Wl)
    lh_phase = conv_taps(conv_ll, p["LH_w"], p["LH_b"], 3, 1, COMPUTE_DTYPE)  # (B,4Co,Hl,Wl)
    conv_lh = depth_to_space(lh_phase, Co)                                    # (B,Co,Hh,Wh)
    # convHH (5x5) with the branch sum fused; final output in f32.
    return conv_taps(h, p["HH_w"], p["HH_b"], 5, 2, jnp.float32, skip=conv_lh)


@jax.jit
def oct_synthesis_forward(params, inputs_h, inputs_l):
    h = inputs_h.astype(COMPUTE_DTYPE)
    l = inputs_l.astype(COMPUTE_DTYPE)
    for lp in params["layers"]:            # d1 .. d4
        h, l = got_conv_s2(lp, h, l)
    return got_conv_endpoint(params["d5"], h, l)     # (B, 3, 16H, 16W) f32, NCHW


# ----------------------------------------------------------------------------
# Parameter init (PyTorch-native layouts) + one-time preparation
# ----------------------------------------------------------------------------
def _init_igdn(key, c):
    k1, k2 = jax.random.split(key)
    gamma = 0.1 * jnp.eye(c, dtype=jnp.float32) + 0.01 * jnp.abs(
        jax.random.normal(k1, (c, c), jnp.float32))
    beta = 1.0 + 0.01 * jnp.abs(jax.random.normal(k2, (c,), jnp.float32))
    return gamma, beta


def init_gotconv_s2(key, cin, cout, scale=0.1):
    ks = jax.random.split(key, 12)
    f = jnp.float32
    hh_g, hh_b = _init_igdn(ks[8], cin)
    ll_g, ll_b = _init_igdn(ks[9], cin)
    lh_g, lh_b = _init_igdn(ks[10], cout)
    hl_g, hl_b = _init_igdn(ks[11], cout)
    return {
        "HH_wt": scale * jax.random.normal(ks[0], (cin, cout, 4, 4), f),   # ConvTranspose2d
        "HH_b": scale * jax.random.normal(ks[1], (cout,), f),
        "LL_wt": scale * jax.random.normal(ks[2], (cin, cout, 4, 4), f),   # ConvTranspose2d
        "LL_b": scale * jax.random.normal(ks[3], (cout,), f),
        "LH_wt": scale * jax.random.normal(ks[4], (cout, cout, 4, 4), f),  # ConvTranspose2d
        "LH_b": scale * jax.random.normal(ks[5], (cout,), f),
        "HL_wt": scale * jax.random.normal(ks[6], (cout, cout, 4, 4), f),  # Conv2d
        "HL_b": scale * jax.random.normal(ks[7], (cout,), f),
        "HH_gamma": hh_g, "HH_beta": hh_b, "LL_gamma": ll_g, "LL_beta": ll_b,
        "LH_gamma": lh_g, "LH_beta": lh_b, "HL_gamma": hl_g, "HL_beta": hl_b,
    }


def init_gotconv_endpoint(key, cin, cout, scale=0.1):
    ks = jax.random.split(key, 6)
    f = jnp.float32
    return {
        "HH_wt": scale * jax.random.normal(ks[0], (cin, cout, 5, 5), f),   # ConvTranspose2d
        "HH_b": scale * jax.random.normal(ks[1], (cout,), f),
        "LL_wt": scale * jax.random.normal(ks[2], (cin, cout, 5, 5), f),   # ConvTranspose2d
        "LL_b": scale * jax.random.normal(ks[3], (cout,), f),
        "LH_wt": scale * jax.random.normal(ks[4], (cout, cout, 4, 4), f),  # ConvTranspose2d
        "LH_b": scale * jax.random.normal(ks[5], (cout,), f),
    }


def init_oct_synthesis(key, num_filters, num_features):
    ks = jax.random.split(key, 5)
    layers, cin = [], num_features
    for i in range(4):
        layers.append(init_gotconv_s2(ks[i], cin, num_filters))
        cin = num_filters
    return {"layers": layers, "d5": init_gotconv_endpoint(ks[4], num_filters, 3)}


def prepare_gotconv_s2(raw):
    hh_w, hh_b = _prep_deconv_k4s2(raw["HH_wt"], raw["HH_b"])
    ll_w, ll_b = _prep_deconv_k4s2(raw["LL_wt"], raw["LL_b"])
    lh_w, lh_b = _prep_deconv_k4s2(raw["LH_wt"], raw["LH_b"])
    hl_w, hl_b = _prep_conv_hl_phase(raw["HL_wt"], raw["HL_b"])

    def g(v):
        return jnp.asarray(v, COMPUTE_DTYPE)

    def bt(v):
        return jnp.asarray(v, jnp.float32).reshape(-1, 1)

    return {
        "HH_w": hh_w, "HH_b": hh_b, "LL_w": ll_w, "LL_b": ll_b,
        "LH_w": lh_w, "LH_b": lh_b, "HL_w": hl_w, "HL_b": hl_b,
        "HH_gamma": g(raw["HH_gamma"]), "HH_beta": bt(raw["HH_beta"]),
        "LL_gamma": g(raw["LL_gamma"]), "LL_beta": bt(raw["LL_beta"]),
        "LH_gamma": g(raw["LH_gamma"]), "LH_beta": bt(raw["LH_beta"]),
        "HL_gamma": g(raw["HL_gamma"]), "HL_beta": bt(raw["HL_beta"]),
    }


def prepare_gotconv_endpoint(raw):
    hh_w, hh_b = _prep_deconv_k5s1(raw["HH_wt"], raw["HH_b"])
    ll_w, ll_b = _prep_deconv_k5s1(raw["LL_wt"], raw["LL_b"])
    lh_w, lh_b = _prep_deconv_k4s2(raw["LH_wt"], raw["LH_b"])
    return {"HH_w": hh_w, "HH_b": hh_b, "LL_w": ll_w, "LL_b": ll_b,
            "LH_w": lh_w, "LH_b": lh_b}


def prepare_oct_synthesis(raw):
    return {"layers": [prepare_gotconv_s2(r) for r in raw["layers"]],
            "d5": prepare_gotconv_endpoint(raw["d5"])}


# ----------------------------------------------------------------------------
# Loop-based numpy references (tiny, exact) for the conv lowerings
# ----------------------------------------------------------------------------
def _ref_conv_transpose(x, wt, bias, stride, pad):
    x = np.asarray(x, np.float32)
    w = np.asarray(wt, np.float32)
    B, Ci, H, W = x.shape
    Co, K = w.shape[1], w.shape[2]
    Ho, Wo = (H - 1) * stride - 2 * pad + K, (W - 1) * stride - 2 * pad + K
    y = np.zeros((B, Co, Ho, Wo), np.float32)
    for ih in range(H):
        for iw in range(W):
            for kh in range(K):
                for kw in range(K):
                    oh, ow = stride * ih + kh - pad, stride * iw + kw - pad
                    if 0 <= oh < Ho and 0 <= ow < Wo:
                        y[:, :, oh, ow] += np.einsum("bi,io->bo", x[:, :, ih, iw],
                                                     w[:, :, kh, kw])
    return y + np.asarray(bias, np.float32)[None, :, None, None]


def _ref_conv(x, w, bias, stride, pad):
    x = np.asarray(x, np.float32)
    w = np.asarray(w, np.float32)
    B, Ci, H, W = x.shape
    Co, K = w.shape[0], w.shape[2]
    xp = np.pad(x, ((0, 0), (0, 0), (pad, pad), (pad, pad)))
    Ho, Wo = (H + 2 * pad - K) // stride + 1, (W + 2 * pad - K) // stride + 1
    y = np.zeros((B, Co, Ho, Wo), np.float32)
    for i in range(Ho):
        for j in range(Wo):
            patch = xp[:, :, i * stride:i * stride + K, j * stride:j * stride + K]
            y[:, :, i, j] = np.einsum("bckl,ockl->bo", patch, w)
    return y + np.asarray(bias, np.float32)[None, :, None, None]


# ----------------------------------------------------------------------------
if __name__ == "__main__":
    key = jax.random.PRNGKey(0)
    kp, kh, kl, kc = jax.random.split(key, 4)
    c = jax.random.split(kc, 9)

    # --- self-check 1: ConvTranspose2d(k4,s2,p1) lowering (3x3 taps + phase planes) ---
    xt = jax.random.normal(c[0], (1, 2, 4, 4), jnp.float32)
    wt = 0.1 * jax.random.normal(c[1], (2, 3, 4, 4), jnp.float32)
    bt = 0.1 * jax.random.normal(c[2], (3,), jnp.float32)
    w_taps, b4 = _prep_deconv_k4s2(wt, bt)
    phase = conv_taps(xt.astype(COMPUTE_DTYPE), w_taps, b4, 3, 1, jnp.float32)
    got = depth_to_space(phase, 3)
    ref = _ref_conv_transpose(xt, wt, bt, stride=2, pad=1)
    np.testing.assert_allclose(np.asarray(got), ref, rtol=5e-2, atol=3e-2)

    # --- self-check 2: ConvTranspose2d(k5,s1,p2) lowering (flipped 5x5 taps) ---
    x5 = jax.random.normal(c[3], (1, 2, 6, 6), jnp.float32)
    w5 = 0.1 * jax.random.normal(c[4], (2, 3, 5, 5), jnp.float32)
    b5 = 0.1 * jax.random.normal(c[5], (3,), jnp.float32)
    wt5, bt5 = _prep_deconv_k5s1(w5, b5)
    got5 = conv_taps(x5.astype(COMPUTE_DTYPE), wt5, bt5, 5, 2, jnp.float32)
    ref5 = _ref_conv_transpose(x5, w5, b5, stride=1, pad=2)
    np.testing.assert_allclose(np.asarray(got5), ref5, rtol=5e-2, atol=3e-2)

    # --- self-check 3: Conv2d(k4,s2,p1) on a 2x-upsampled input consumed as phase planes ---
    xh = jax.random.normal(c[6], (1, 2, 8, 8), jnp.float32)
    wc = 0.1 * jax.random.normal(c[7], (3, 2, 4, 4), jnp.float32)
    bc = 0.1 * jax.random.normal(c[8], (3,), jnp.float32)
    ph = xh.reshape(1, 2, 4, 2, 4, 2)                       # (b, c, i, r, j, s)
    ph = jnp.transpose(ph, (0, 3, 5, 1, 2, 4)).reshape(1, 8, 4, 4)
    wcp, bcp = _prep_conv_hl_phase(wc, bc)
    gotc = conv_taps(ph.astype(COMPUTE_DTYPE), wcp, bcp, 3, 1, jnp.float32)
    refc = _ref_conv(xh, wc, bc, stride=2, pad=1)
    np.testing.assert_allclose(np.asarray(gotc), refc, rtol=5e-2, atol=3e-2)

    # --- full forward ---
    batch = 2
    num_features = 4
    num_filters = 8
    H = W = 8           # high-frequency branch spatial; low-frequency branch is H//2

    raw_params = init_oct_synthesis(kp, num_filters, num_features)
    prepared = prepare_oct_synthesis(raw_params)

    inputs_h = jax.random.normal(kh, (batch, num_features, H, W), jnp.float32)
    inputs_l = jax.random.normal(kl, (batch, num_features, H // 2, W // 2), jnp.float32)

    out = jax.block_until_ready(oct_synthesis_forward(prepared, inputs_h, inputs_l))

    # d1..d4 each upsample the high branch 2x; the endpoint layer d5 keeps resolution.
    assert out.shape == (batch, 3, 16 * H, 16 * W), out.shape
    assert bool(jnp.all(jnp.isfinite(out)))

    print("KERNEL_OK")
</pallas_src>

<mosaic_0001>
module attributes {stable_mosaic.version = 11 : i64} {
  func.func @kernel(%arg0: i32, %arg1: memref<1x2x26xbf16, #tpu.memory_space<vmem>>, %arg2: memref<9x12x2xbf16, #tpu.memory_space<vmem>>, %arg3: memref<9x16xbf16, #tpu.memory_space<vmem>>, %arg4: memref<12x1xf32, #tpu.memory_space<vmem>>, %arg5: memref<1x12x16xf32, #tpu.memory_space<vmem>>, %arg6: memref<12x16xf32, #tpu.memory_space<vmem>>) attributes {dimension_semantics = [#tpu.dimension_semantics<parallel>], iteration_bounds = array<i64: 1>, scalar_prefetch = 0 : i64, scratch_operands = 1 : i64, tpu.core_type = #tpu.core_type<tc>, window_params = [{transform_indices = @transform_0, window_bounds = array<i64: 1, 2, 26>}, {pipeline_mode = #tpu.pipeline_mode<synchronous>, transform_indices = @transform_1, window_bounds = array<i64: 9, 12, 2>}, {pipeline_mode = #tpu.pipeline_mode<synchronous>, transform_indices = @transform_2, window_bounds = array<i64: 9, 16>}, {pipeline_mode = #tpu.pipeline_mode<synchronous>, transform_indices = @transform_3, window_bounds = array<i64: 12, 1>}, {transform_indices = @transform_4, window_bounds = array<i64: 1, 12, 16>}]} {
    %cst = arith.constant 0.000000e+00 : f32
    %0 = vector.broadcast %cst : f32 to vector<12x16xf32>
    %c0 = arith.constant 0 : index
    %c0_0 = arith.constant 0 : index
    %1 = vector.load %arg6[%c0, %c0_0] : memref<12x16xf32, #tpu.memory_space<vmem>>, vector<12x16xf32>
    tpu.vector_store %arg6[%c0, %c0_0], %0 {strides = array<i32>} : memref<12x16xf32, #tpu.memory_space<vmem>>, vector<12x16xf32>,
    %c0_1 = arith.constant 0 : index
    %c0_2 = arith.constant 0 : index
    %c0_3 = arith.constant 0 : index
    %2 = vector.load %arg1[%c0_1, %c0_2, %c0_3] : memref<1x2x26xbf16, #tpu.memory_space<vmem>>, vector<1x2x16xbf16>
    %3 = vector.shape_cast %2 : vector<1x2x16xbf16> to vector<2x16xbf16>
    %c0_4 = arith.constant 0 : index
    %c0_5 = arith.constant 0 : index
    %4 = vector.load %arg3[%c0_4, %c0_5] : memref<9x16xbf16, #tpu.memory_space<vmem>>, vector<1x16xbf16>
    %5 = vector.broadcast %4 : vector<1x16xbf16> to vector<2x16xbf16>
    %6 = arith.mulf %3, %5 : vector<2x16xbf16>
    %c0_6 = arith.constant 0 : index
    %c0_7 = arith.constant 0 : index
    %7 = vector.load %arg6[%c0_6, %c0_7] : memref<12x16xf32, #tpu.memory_space<vmem>>, vector<12x16xf32>
    %c0_8 = arith.constant 0 : index
    %c0_9 = arith.constant 0 : index
    %c0_10 = arith.constant 0 : index
    %8 = vector.load %arg2[%c0_8, %c0_9, %c0_10] : memref<9x12x2xbf16, #tpu.memory_space<vmem>>, vector<1x12x2xbf16>
    %9 = vector.shape_cast %8 : vector<1x12x2xbf16> to vector<12x2xbf16>
    %cst_11 = arith.constant dense<0.000000e+00> : vector<12x16xf32>
    %10 = tpu.matmul %9, %6, %cst_11 {dimension_numbers = #tpu.dot_dimension_numbers<[1], [0], [0], [1], [0, 0, 1, 1], [], []>} : vector<12x2xbf16>, vector<2x16xbf16>, vector<12x16xf32> -> vector<12x16xf32>
    %11 = arith.addf %7, %10 : vector<12x16xf32>
    %c0_12 = arith.constant 0 : index
    %c0_13 = arith.constant 0 : index
    %12 = vector.load %arg6[%c0_12, %c0_13] : memref<12x16xf32, #tpu.memory_space<vmem>>, vector<12x16xf32>
    tpu.vector_store %arg6[%c0_12, %c0_13], %11 {strides = array<i32>} : memref<12x16xf32, #tpu.memory_space<vmem>>, vector<12x16xf32>,
    %c0_14 = arith.constant 0 : index
    %c0_15 = arith.constant 0 : index
    %c1 = arith.constant 1 : index
    %13 = vector.load %arg1[%c0_14, %c0_15, %c1] : memref<1x2x26xbf16, #tpu.memory_space<vmem>>, vector<1x2x16xbf16>
    %14 = vector.shape_cast %13 : vector<1x2x16xbf16> to vector<2x16xbf16>
    %c1_16 = arith.constant 1 : index
    %c0_17 = arith.constant 0 : index
    %15 = vector.load %arg3[%c1_16, %c0_17] : memref<9x16xbf16, #tpu.memory_space<vmem>>, vector<1x16xbf16>
    %16 = vector.broadcast %15 : vector<1x16xbf16> to vector<2x16xbf16>
    %17 = arith.mulf %14, %16 : vector<2x16xbf16>
    %c0_18 = arith.constant 0 : index
    %c0_19 = arith.constant 0 : index
    %18 = vector.load %arg6[%c0_18, %c0_19] : memref<12x16xf32, #tpu.memory_space<vmem>>, vector<12x16xf32>
    %c1_20 = arith.constant 1 : index
    %c0_21 = arith.constant 0 : index
    %c0_22 = arith.constant 0 : index
    %19 = vector.load %arg2[%c1_20, %c0_21, %c0_22] : memref<9x12x2xbf16, #tpu.memory_space<vmem>>, vector<1x12x2xbf16>
    %20 = vector.shape_cast %19 : vector<1x12x2xbf16> to vector<12x2xbf16>
    %cst_23 = arith.constant dense<0.000000e+00> : vector<12x16xf32>
    %21 = tpu.matmul %20, %17, %cst_23 {dimension_numbers = #tpu.dot_dimension_numbers<[1], [0], [0], [1], [0, 0, 1, 1], [], []>} : vector<12x2xbf16>, vector<2x16xbf16>, vector<12x16xf32> -> vector<12x16xf32>
    %22 = arith.addf %18, %21 : vector<12x16xf32>
    %c0_24 = arith.constant 0 : index
    %c0_25 = arith.constant 0 : index
    %23 = vector.load %arg6[%c0_24, %c0_25] : memref<12x16xf32, #tpu.memory_space<vmem>>, vector<12x16xf32>
    tpu.vector_store %arg6[%c0_24, %c0_25], %22 {strides = array<i32>} : memref<12x16xf32, #tpu.memory_space<vmem>>, vector<12x16xf32>,
    %c0_26 = arith.constant 0 : index
    %c0_27 = arith.constant 0 : index
    %c2 = arith.constant 2 : index
    %24 = vector.load %arg1[%c0_26, %c0_27, %c2] : memref<1x2x26xbf16, #tpu.memory_space<vmem>>, vector<1x2x16xbf16>
    %25 = vector.shape_cast %24 : vector<1x2x16xbf16> to vector<2x16xbf16>
    %c2_28 = arith.constant 2 : index
    %c0_29 = arith.constant 0 : index
    %26 = vector.load %arg3[%c2_28, %c0_29] : memref<9x16xbf16, #tpu.memory_space<vmem>>, vector<1x16xbf16>
    %27 = vector.broadcast %26 : vector<1x16xbf16> to vector<2x16xbf16>
    %28 = arith.mulf %25, %27 : vector<2x16xbf16>
    %c0_30 = arith.constant 0 : index
    %c0_31 = arith.constant 0 : index
    %29 = vector.load %arg6[%c0_30, %c0_31] : memref<12x16xf32, #tpu.memory_space<vmem>>, vector<12x16xf32>
    %c2_32 = arith.constant 2 : index
    %c0_33 = arith.constant 0 : index
    %c0_34 = arith.constant 0 : index
    %30 = vector.load %arg2[%c2_32, %c0_33, %c0_34] : memref<9x12x2xbf16, #tpu.memory_space<vmem>>, vector<1x12x2xbf16>
    %31 = vector.shape_cast %30 : vector<1x12x2xbf16> to vector<12x2xbf16>
    %cst_35 = arith.constant dense<0.000000e+00> : vector<12x16xf32>
    %32 = tpu.matmul %31, %28, %cst_35 {dimension_numbers = #tpu.dot_dimension_numbers<[1], [0], [0], [1], [0, 0, 1, 1], [], []>} : vector<12x2xbf16>, vector<2x16xbf16>, vector<12x16xf32> -> vector<12x16xf32>
    %33 = arith.addf %29, %32 : vector<12x16xf32>
    %c0_36 = arith.constant 0 : index
    %c0_37 = arith.constant 0 : index
    %34 = vector.load %arg6[%c0_36, %c0_37] : memref<12x16xf32, #tpu.memory_space<vmem>>, vector<12x16xf32>
    tpu.vector_store %arg6[%c0_36, %c0_37], %33 {strides = array<i32>} : memref<12x16xf32, #tpu.memory_space<vmem>>, vector<12x16xf32>,
    %c0_38 = arith.constant 0 : index
    %c0_39 = arith.constant 0 : index
    %c4 = arith.constant 4 : index
    %35 = vector.load %arg1[%c0_38, %c0_39, %c4] : memref<1x2x26xbf16, #tpu.memory_space<vmem>>, vector<1x2x16xbf16>
    %36 = vector.shape_cast %35 : vector<1x2x16xbf16> to vector<2x16xbf16>
    %c3 = arith.constant 3 : index
    %c0_40 = arith.constant 0 : index
    %37 = vector.load %arg3[%c3, %c0_40] : memref<9x16xbf16, #tpu.memory_space<vmem>>, vector<1x16xbf16>
    %38 = vector.broadcast %37 : vector<1x16xbf16> to vector<2x16xbf16>
    %39 = arith.mulf %36, %38 : vector<2x16xbf16>
    %c0_41 = arith.constant 0 : index
    %c0_42 = arith.constant 0 : index
    %40 = vector.load %arg6[%c0_41, %c0_42] : memref<12x16xf32, #tpu.memory_space<vmem>>, vector<12x16xf32>
    %c3_43 = arith.constant 3 : index
    %c0_44 = arith.constant 0 : index
    %c0_45 = arith.constant 0 : index
    %41 = vector.load %arg2[%c3_43, %c0_44, %c0_45] : memref<9x12x2xbf16, #tpu.memory_space<vmem>>, vector<1x12x2xbf16>
    %42 = vector.shape_cast %41 : vector<1x12x2xbf16> to vector<12x2xbf16>
    %cst_46 = arith.constant dense<0.000000e+00> : vector<12x16xf32>
    %43 = tpu.matmul %42, %39, %cst_46 {dimension_numbers = #tpu.dot_dimension_numbers<[1], [0], [0], [1], [0, 0, 1, 1], [], []>} : vector<12x2xbf16>, vector<2x16xbf16>, vector<12x16xf32> -> vector<12x16xf32>
    %44 = arith.addf %40, %43 : vector<12x16xf32>
    %c0_47 = arith.constant 0 : index
    %c0_48 = arith.constant 0 : index
    %45 = vector.load %arg6[%c0_47, %c0_48] : memref<12x16xf32, #tpu.memory_space<vmem>>, vector<12x16xf32>
    tpu.vector_store %arg6[%c0_47, %c0_48], %44 {strides = array<i32>} : memref<12x16xf32, #tpu.memory_space<vmem>>, vector<12x16xf32>,
    %c0_49 = arith.constant 0 : index
    %c0_50 = arith.constant 0 : index
    %c5 = arith.constant 5 : index
    %46 = vector.load %arg1[%c0_49, %c0_50, %c5] : memref<1x2x26xbf16, #tpu.memory_space<vmem>>, vector<1x2x16xbf16>
    %47 = vector.shape_cast %46 : vector<1x2x16xbf16> to vector<2x16xbf16>
    %c0_51 = arith.constant 0 : index
    %c0_52 = arith.constant 0 : index
    %48 = vector.load %arg6[%c0_51, %c0_52] : memref<12x16xf32, #tpu.memory_space<vmem>>, vector<12x16xf32>
    %c4_53 = arith.constant 4 : index
    %c0_54 = arith.constant 0 : index
    %c0_55 = arith.constant 0 : index
    %49 = vector.load %arg2[%c4_53, %c0_54, %c0_55] : memref<9x12x2xbf16, #tpu.memory_space<vmem>>, vector<1x12x2xbf16>
    %50 = vector.shape_cast %49 : vector<1x12x2xbf16> to vector<12x2xbf16>
    %cst_56 = arith.constant dense<0.000000e+00> : vector<12x16xf32>
    %51 = tpu.matmul %50, %47, %cst_56 {dimension_numbers = #tpu.dot_dimension_numbers<[1], [0], [0], [1], [0, 0, 1, 1], [], []>} : vector<12x2xbf16>, vector<2x16xbf16>, vector<12x16xf32> -> vector<12x16xf32>
    %52 = arith.addf %48, %51 : vector<12x16xf32>
    %c0_57 = arith.constant 0 : index
    %c0_58 = arith.constant 0 : index
    %53 = vector.load %arg6[%c0_57, %c0_58] : memref<12x16xf32, #tpu.memory_space<vmem>>, vector<12x16xf32>
    tpu.vector_store %arg6[%c0_57, %c0_58], %52 {strides = array<i32>} : memref<12x16xf32, #tpu.memory_space<vmem>>, vector<12x16xf32>,
    %c0_59 = arith.constant 0 : index
    %c0_60 = arith.constant 0 : index
    %c6 = arith.constant 6 : index
    %54 = vector.load %arg1[%c0_59, %c0_60, %c6] : memref<1x2x26xbf16, #tpu.memory_space<vmem>>, vector<1x2x16xbf16>
    %55 = vector.shape_cast %54 : vector<1x2x16xbf16> to vector<2x16xbf16>
    %c5_61 = arith.constant 5 : index
    %c0_62 = arith.constant 0 : index
    %56 = vector.load %arg3[%c5_61, %c0_62] : memref<9x16xbf16, #tpu.memory_space<vmem>>, vector<1x16xbf16>
    %57 = vector.broadcast %56 : vector<1x16xbf16> to vector<2x16xbf16>
    %58 = arith.mulf %55, %57 : vector<2x16xbf16>
    %c0_63 = arith.constant 0 : index
    %c0_64 = arith.constant 0 : index
    %59 = vector.load %arg6[%c0_63, %c0_64] : memref<12x16xf32, #tpu.memory_space<vmem>>, vector<12x16xf32>
    %c5_65 = arith.constant 5 : index
    %c0_66 = arith.constant 0 : index
    %c0_67 = arith.constant 0 : index
    %60 = vector.load %arg2[%c5_65, %c0_66, %c0_67] : memref<9x12x2xbf16, #tpu.memory_space<vmem>>, vector<1x12x2xbf16>
    %61 = vector.shape_cast %60 : vector<1x12x2xbf16> to vector<12x2xbf16>
    %cst_68 = arith.constant dense<0.000000e+00> : vector<12x16xf32>
    %62 = tpu.matmul %61, %58, %cst_68 {dimension_numbers = #tpu.dot_dimension_numbers<[1], [0], [0], [1], [0, 0, 1, 1], [], []>} : vector<12x2xbf16>, vector<2x16xbf16>, vector<12x16xf32> -> vector<12x16xf32>
    %63 = arith.addf %59, %62 : vector<12x16xf32>
    %c0_69 = arith.constant 0 : index
    %c0_70 = arith.constant 0 : index
    %64 = vector.load %arg6[%c0_69, %c0_70] : memref<12x16xf32, #tpu.memory_space<vmem>>, vector<12x16xf32>
    tpu.vector_store %arg6[%c0_69, %c0_70], %63 {strides = array<i32>} : memref<12x16xf32, #tpu.memory_space<vmem>>, vector<12x16xf32>,
    %c0_71 = arith.constant 0 : index
    %c0_72 = arith.constant 0 : index
    %c8 = arith.constant 8 : index
    %65 = vector.load %arg1[%c0_71, %c0_72, %c8] : memref<1x2x26xbf16, #tpu.memory_space<vmem>>, vector<1x2x16xbf16>
    %66 = vector.shape_cast %65 : vector<1x2x16xbf16> to vector<2x16xbf16>
    %c6_73 = arith.constant 6 : index
    %c0_74 = arith.constant 0 : index
    %67 = vector.load %arg3[%c6_73, %c0_74] : memref<9x16xbf16, #tpu.memory_space<vmem>>, vector<1x16xbf16>
    %68 = vector.broadcast %67 : vector<1x16xbf16> to vector<2x16xbf16>
    %69 = arith.mulf %66, %68 : vector<2x16xbf16>
    %c0_75 = arith.constant 0 : index
    %c0_76 = arith.constant 0 : index
    %70 = vector.load %arg6[%c0_75, %c0_76] : memref<12x16xf32, #tpu.memory_space<vmem>>, vector<12x16xf32>
    %c6_77 = arith.constant 6 : index
    %c0_78 = arith.constant 0 : index
    %c0_79 = arith.constant 0 : index
    %71 = vector.load %arg2[%c6_77, %c0_78, %c0_79] : memref<9x12x2xbf16, #tpu.memory_space<vmem>>, vector<1x12x2xbf16>
    %72 = vector.shape_cast %71 : vector<1x12x2xbf16> to vector<12x2xbf16>
    %cst_80 = arith.constant dense<0.000000e+00> : vector<12x16xf32>
    %73 = tpu.matmul %72, %69, %cst_80 {dimension_numbers = #tpu.dot_dimension_numbers<[1], [0], [0], [1], [0, 0, 1, 1], [], []>} : vector<12x2xbf16>, vector<2x16xbf16>, vector<12x16xf32> -> vector<12x16xf32>
    %74 = arith.addf %70, %73 : vector<12x16xf32>
    %c0_81 = arith.constant 0 : index
    %c0_82 = arith.constant 0 : index
    %75 = vector.load %arg6[%c0_81, %c0_82] : memref<12x16xf32, #tpu.memory_space<vmem>>, vector<12x16xf32>
    tpu.vector_store %arg6[%c0_81, %c0_82], %74 {strides = array<i32>} : memref<12x16xf32, #tpu.memory_space<vmem>>, vector<12x16xf32>,
    %c0_83 = arith.constant 0 : index
    %c0_84 = arith.constant 0 : index
    %c9 = arith.constant 9 : index
    %76 = vector.load %arg1[%c0_83, %c0_84, %c9] : memref<1x2x26xbf16, #tpu.memory_space<vmem>>, vector<1x2x16xbf16>
    %77 = vector.shape_cast %76 : vector<1x2x16xbf16> to vector<2x16xbf16>
    %c7 = arith.constant 7 : index
    %c0_85 = arith.constant 0 : index
    %78 = vector.load %arg3[%c7, %c0_85] : memref<9x16xbf16, #tpu.memory_space<vmem>>, vector<1x16xbf16>
    %79 = vector.broadcast %78 : vector<1x16xbf16> to vector<2x16xbf16>
    %80 = arith.mulf %77, %79 : vector<2x16xbf16>
    %c0_86 = arith.constant 0 : index
    %c0_87 = arith.constant 0 : index
    %81 = vector.load %arg6[%c0_86, %c0_87] : memref<12x16xf32, #tpu.memory_space<vmem>>, vector<12x16xf32>
    %c7_88 = arith.constant 7 : index
    %c0_89 = arith.constant 0 : index
    %c0_90 = arith.constant 0 : index
    %82 = vector.load %arg2[%c7_88, %c0_89, %c0_90] : memref<9x12x2xbf16, #tpu.memory_space<vmem>>, vector<1x12x2xbf16>
    %83 = vector.shape_cast %82 : vector<1x12x2xbf16> to vector<12x2xbf16>
    %cst_91 = arith.constant dense<0.000000e+00> : vector<12x16xf32>
    %84 = tpu.matmul %83, %80, %cst_91 {dimension_numbers = #tpu.dot_dimension_numbers<[1], [0], [0], [1], [0, 0, 1, 1], [], []>} : vector<12x2xbf16>, vector<2x16xbf16>, vector<12x16xf32> -> vector<12x16xf32>
    %85 = arith.addf %81, %84 : vector<12x16xf32>
    %c0_92 = arith.constant 0 : index
    %c0_93 = arith.constant 0 : index
    %86 = vector.load %arg6[%c0_92, %c0_93] : memref<12x16xf32, #tpu.memory_space<vmem>>, vector<12x16xf32>
    tpu.vector_store %arg6[%c0_92, %c0_93], %85 {strides = array<i32>} : memref<12x16xf32, #tpu.memory_space<vmem>>, vector<12x16xf32>,
    %c0_94 = arith.constant 0 : index
    %c0_95 = arith.constant 0 : index
    %c10 = arith.constant 10 : index
    %87 = vector.load %arg1[%c0_94, %c0_95, %c10] : memref<1x2x26xbf16, #tpu.memory_space<vmem>>, vector<1x2x16xbf16>
    %88 = vector.shape_cast %87 : vector<1x2x16xbf16> to vector<2x16xbf16>
    %c8_96 = arith.constant 8 : index
    %c0_97 = arith.constant 0 : index
    %89 = vector.load %arg3[%c8_96, %c0_97] : memref<9x16xbf16, #tpu.memory_space<vmem>>, vector<1x16xbf16>
    %90 = vector.broadcast %89 : vector<1x16xbf16> to vector<2x16xbf16>
    %91 = arith.mulf %88, %90 : vector<2x16xbf16>
    %c0_98 = arith.constant 0 : index
    %c0_99 = arith.constant 0 : index
    %92 = vector.load %arg6[%c0_98, %c0_99] : memref<12x16xf32, #tpu.memory_space<vmem>>, vector<12x16xf32>
    %c8_100 = arith.constant 8 : index
    %c0_101 = arith.constant 0 : index
    %c0_102 = arith.constant 0 : index
    %93 = vector.load %arg2[%c8_100, %c0_101, %c0_102] : memref<9x12x2xbf16, #tpu.memory_space<vmem>>, vector<1x12x2xbf16>
    %94 = vector.shape_cast %93 : vector<1x12x2xbf16> to vector<12x2xbf16>
    %cst_103 = arith.constant dense<0.000000e+00> : vector<12x16xf32>
    %95 = tpu.matmul %94, %91, %cst_103 {dimension_numbers = #tpu.dot_dimension_numbers<[1], [0], [0], [1], [0, 0, 1, 1], [], []>} : vector<12x2xbf16>, vector<2x16xbf16>, vector<12x16xf32> -> vector<12x16xf32>
    %96 = arith.addf %92, %95 : vector<12x16xf32>
    %c0_104 = arith.constant 0 : index
    %c0_105 = arith.constant 0 : index
    %97 = vector.load %arg6[%c0_104, %c0_105] : memref<12x16xf32, #tpu.memory_space<vmem>>, vector<12x16xf32>
    tpu.vector_store %arg6[%c0_104, %c0_105], %96 {strides = array<i32>} : memref<12x16xf32, #tpu.memory_space<vmem>>, vector<12x16xf32>,
    %c0_106 = arith.constant 0 : index
    %c0_107 = arith.constant 0 : index
    %98 = vector.load %arg6[%c0_106, %c0_107] : memref<12x16xf32, #tpu.memory_space<vmem>>, vector<12x16xf32>
    %c0_108 = arith.constant 0 : index
    %c0_109 = arith.constant 0 : index
    %99 = vector.load %arg4[%c0_108, %c0_109] : memref<12x1xf32, #tpu.memory_space<vmem>>, vector<12x1xf32>
    %100 = vector.broadcast %99 : vector<12x1xf32> to vector<12x16xf32>
    %101 = arith.addf %98, %100 : vector<12x16xf32>
    %c0_110 = arith.constant 0 : index
    %c0_111 = arith.constant 0 : index
    %c0_112 = arith.constant 0 : index
    %102 = vector.load %arg5[%c0_110, %c0_111, %c0_112] : memref<1x12x16xf32, #tpu.memory_space<vmem>>, vector<1x12x16xf32>
    %103 = vector.shape_cast %102 : vector<1x12x16xf32> to vector<12x16xf32>
    %104 = vector.shape_cast %101 : vector<12x16xf32> to vector<1x12x16xf32>
    tpu.vector_store %arg5[%c0_110, %c0_111, %c0_112], %104 {strides = array<i32>} : memref<1x12x16xf32, #tpu.memory_space<vmem>>, vector<1x12x16xf32>,
    return
  }
  func.func @transform_0(%arg0: i32) -> (i32, i32, i32) {
    %c0_i32 = arith.constant 0 : i32
    %c0_i32_0 = arith.constant 0 : i32
    %c0_i32_1 = arith.constant 0 : i32
    return %arg0, %c0_i32, %c0_i32_0 : i32, i32, i32
  }
  func.func @transform_1(%arg0: i32) -> (i32, i32, i32) {
    %c0_i32 = arith.constant 0 : i32
    %c0_i32_0 = arith.constant 0 : i32
    %c0_i32_1 = arith.constant 0 : i32
    %c0_i32_2 = arith.constant 0 : i32
    return %c0_i32, %c0_i32_0, %c0_i32_1 : i32, i32, i32
  }
  func.func @transform_2(%arg0: i32) -> (i32, i32) {
    %c0_i32 = arith.constant 0 : i32
    %c0_i32_0 = arith.constant 0 : i32
    %c0_i32_1 = arith.constant 0 : i32
    return %c0_i32, %c0_i32_0 : i32, i32
  }
  func.func @transform_3(%arg0: i32) -> (i32, i32) {
    %c0_i32 = arith.constant 0 : i32
    %c0_i32_0 = arith.constant 0 : i32
    %c0_i32_1 = arith.constant 0 : i32
    return %c0_i32, %c0_i32_0 : i32, i32
  }
  func.func @transform_4(%arg0: i32) -> (i32, i32, i32) {
    %c0_i32 = arith.constant 0 : i32
    %c0_i32_0 = arith.constant 0 : i32
    %c0_i32_1 = arith.constant 0 : i32
    return %arg0, %c0_i32, %c0_i32_0 : i32, i32, i32
  }
}

</mosaic_0001>

<llo_original>
// kernel: tpu_custom_call.1
$region0: #{tpu_custom_call.1}
  #allocation0 [shape = 'u32[]', space=smem, size = 0x4, offset = 0x4, fixed_abs, tag = 'smem constant byte address 0x4 - core index']
  #allocation1 [shape = 'u32[144,128]{1,0:T(1,128)}', space=vmem, size = 0x12000, scoped, tag = 'internal scratch']
  #allocation2 [shape = 'f32[12,16]{1,0:T(8,128)}', space=vmem, size = 0x2000, scoped, tag = 'scratch operand']
  %s0 = inlined_call_operand.vmem [shape: bf16[1,2,26], index: 0, kind: input, shape index: {}]
  %s1 = inlined_call_operand.vmem [shape: bf16[9,12,2], index: 1, kind: input, shape index: {}]
  %s2 = inlined_call_operand.vmem [shape: bf16[9,16], index: 2, kind: input, shape index: {}]
  %s3 = inlined_call_operand.vmem [shape: f32[12,1], index: 3, kind: input, shape index: {}]
  %s4 = inlined_call_operand.vmem [shape: f32[1,12,16], index: 4, kind: output, shape index: {}]
  %s5 = sld [smem:[#allocation0]]
  $region26: #{tpu_custom_call.1} parent=0
    _
  %s7 = ssub.s32 1, %s5
  %s8 = scalar_select 0, %s7, %s5
  // Predicated region
  $region2: #{tpu_custom_call.1} parent=0 // pred_check
    _
  $region3: #{tpu_custom_call.1} parent=0 // pred_check_branch
    %10 = sbr.rel (0) target = $region5
  $region4: #{tpu_custom_call.1} parent=0 // pred_region
    _
  $region5: #{tpu_custom_call.1} parent=0 // pred_fallthru
    _
  // Predicated region
  $region6: #{tpu_custom_call.1} parent=0 // pred_check
    _
  $region7: #{tpu_custom_call.1} parent=0 // pred_check_branch
    %12 = sbr.rel (0) target = $region9
  $region8: #{tpu_custom_call.1} parent=0 // pred_region
    _
  $region9: #{tpu_custom_call.1} parent=0 // pred_fallthru
    _
  // Predicated region
  $region10: #{tpu_custom_call.1} parent=0 // pred_check
    _
  $region11: #{tpu_custom_call.1} parent=0 // pred_check_branch
    %14 = sbr.rel (0) target = $region13
  $region12: #{tpu_custom_call.1} parent=0 // pred_region
    _
  $region13: #{tpu_custom_call.1} parent=0 // pred_fallthru
    _
  // Predicated region
  $region14: #{tpu_custom_call.1} parent=0 // pred_check
    _
  $region15: #{tpu_custom_call.1} parent=0 // pred_check_branch
    %16 = sbr.rel (0) target = $region17
  $region16: #{tpu_custom_call.1} parent=0 // pred_region
    _
  $region17: #{tpu_custom_call.1} parent=0 // pred_fallthru
    _
  %vm18 = vcmask 130048
  %19 = vst.msk [vmem:[#allocation2] sm:$0xff] %vm18, 0.0
  %vm20 = vcmask 125952
  %21 = vst.msk [vmem:[#allocation2 + $0x8] sm:$0xf] %vm20, 0.0
  %v22 = vld [vmem:[%s0] sm:$0x1]
  %v23 = vld [vmem:[%s2] sm:$0x1]
  %v25 = vpack.i.b16 %v23, %v23
  %v27 = vlaneseq
  %v28 = vshrl.u32 %v27, 7
  %v29 = vsub.s32 0, %v28
  %v30 = vrot.slane %v25, %v29
  %v31 = vmul.bf16 %v22, %v30
  %v32 = vld [vmem:[#allocation2] sm:$0xff]
  %v33 = vld [vmem:[#allocation2 + $0x8] sm:$0xf]
  %v34 = vld [vmem:[%s1] sm:$0xf]
  %v35 = vld [vmem:[%s1 + $0x4] sm:$0x3]
  %v38 = vunpack.c.l.b16 %v34
  %v39 = vunpack.c.l.b16 %v35
  %v40 = vpack.c.b16 %v39, %v38
  %vm41 = vcmask 15360
  %v43 = vsel %vm41, %v40, 0
  %vm45 = vcmask 1040384
  %v47 = vsel %vm45, %v31, 0
  %49 = vmatprep.subr.bf16.mxu0 0
  %50 = vmatpush1.bf16.msra.mxu0 0
  %51 = vmatprep.subr.bf16.mxu0 0
  %52 = vmatpush1.bf16.msra.mxu0 0
  %53 = vmatprep.subr.bf16.mxu0 0
  %54 = vmatpush1.bf16.msra.mxu0 0
  %55 = vmatprep.subr.bf16.mxu0 0
  %56 = vmatpush1.bf16.msra.mxu0 0
  %57 = vmatprep.subr.bf16.mxu0 0
  %58 = vmatpush1.bf16.msra.mxu0 0
  %59 = vmatprep.subr.bf16.mxu0 0
  %60 = vmatpush1.bf16.msra.mxu0 0
  %61 = vmatprep.subr.bf16.mxu0 0
  %62 = vmatpush1.bf16.msra.mxu0 0
  %63 = vmatprep.subr.bf16.mxu0 0
  %64 = vmatpush1.bf16.msra.mxu0 %v47
  %65 = vmatprep.subr.bf16.mxu0 0
  %66 = vmatpush2.bf16.msra.mxu0 0
  %67 = vmatprep.subr.bf16.mxu0 0
  %68 = vmatpush2.bf16.msra.mxu0 0
  %69 = vmatprep.subr.bf16.mxu0 0
  %70 = vmatpush2.bf16.msra.mxu0 0
  %71 = vmatprep.subr.bf16.mxu0 0
  %72 = vmatpush2.bf16.msra.mxu0 0
  %73 = vmatprep.subr.bf16.mxu0 0
  %74 = vmatpush2.bf16.msra.mxu0 0
  %75 = vmatprep.subr.bf16.mxu0 0
  %76 = vmatpush2.bf16.msra.mxu0 0
  %77 = vmatprep.subr.bf16.mxu0 0
  %78 = vmatpush2.bf16.msra.mxu0 0
  %79 = vmatprep.subr.bf16.mxu0 0
  %80 = vmatpush2.bf16.msra.mxu0 0
  %81 = vmatprep.mubr.bf16.mxu0 0
  %82 = vmatmul.mubr.bf16.gmra.mxu0 %v43
  %v83 = vpop.f32.mrf.mxu0
  %v84 = vadd.f32 0.0, %v83
  %v85 = vpop.f32.mrf.mxu0
  %v86 = vpop.f32.mrf.mxu0
  %v87 = vadd.f32 0.0, %v86
  %v88 = vpop.f32.mrf.mxu0
  %89 = vdwg.mxu0
  %v90 = vadd.f32 %v32, %v84
  %v91 = vadd.f32 %v33, %v87
  %92 = vst.msk [vmem:[#allocation2] sm:$0xff] %vm18, %v90
  %93 = vst.msk [vmem:[#allocation2 + $0x8] sm:$0xf] %vm20, %v91
  %v94 = vld [vmem:[%s0] sm:$0x1]
  %v95 = vld [vmem:[%s2] sm:$0x1]
  %v97 = vshrl.u32 %v95, 16
  %v98 = vpack.i.b16 %v97, %v97
  %v100 = vlaneseq
  %v101 = vshrl.u32 %v100, 7
  %v102 = vsub.s32 0, %v101
  %v103 = vrot.slane %v98, %v102
  %v106 = vunpack.c.l.s4 1966171168
  %v107 = vunpack.c.0.s8 %v106
  %v108 = vlaneseq
  %v109 = vshrl.u32 %v108, 7
  %v110 = vsub.s32 %v107, %v109
  %v111 = vrot.slane %v103, %v110
  %v113 = vunpack.c.l.s4 1966171168
  %v114 = vunpack.c.0.s8 %v113
  %v115 = vlaneseq
  %v116 = vshrl.u32 %v115, 7
  %v117 = vsub.s32 %v114, %v116
  %v118 = vrot.slane %v111, %v117
  %119 = vrot.lane.b32.xlu0 %v118, 1
  %v120 = vpop.permute.xlu0 %119
  %v122 = vmul.bf16 %v94, %v120
  %v123 = vld [vmem:[#allocation2] sm:$0xff]
  %v124 = vld [vmem:[#allocation2 + $0x8] sm:$0xf]
  %s125 = scalar_lea.vmem %s1, 8
  %v126 = vld [vmem:[%s125] sm:$0xf]
  %v127 = vld [vmem:[%s125 + $0x4] sm:$0x3]
  %v130 = vunpack.c.l.b16 %v126
  %v131 = vunpack.c.l.b16 %v127
  %v132 = vpack.c.b16 %v131, %v130
  %v135 = vunpack.c.l.s4 1966171168
  %v136 = vunpack.c.0.s8 %v135
  %v137 = vlaneseq
  %v138 = vshrl.u32 %v137, 7
  %v139 = vsub.s32 %v136, %v138
  %v140 = vrot.slane %v122, %v139
  %v142 = vunpack.c.l.s4 1966171168
  %v143 = vunpack.c.0.s8 %v142
  %v144 = vlaneseq
  %v145 = vshrl.u32 %v144, 7
  %v146 = vsub.s32 %v143, %v145
  %v147 = vrot.slane %v140, %v146
  %148 = vrot.lane.b32.xlu0 %v147, 127
  %v149 = vpop.permute.xlu0 %148
  %v151 = vsel %vm41, %v132, 0
  %v154 = vsel %vm45, %v149, 0
  %156 = vmatprep.subr.bf16.mxu0 0
  %157 = vmatpush1.bf16.msra.mxu0 0
  %158 = vmatprep.subr.bf16.mxu0 0
  %159 = vmatpush1.bf16.msra.mxu0 0
  %160 = vmatprep.subr.bf16.mxu0 0
  %161 = vmatpush1.bf16.msra.mxu0 0
  %162 = vmatprep.subr.bf16.mxu0 0
  %163 = vmatpush1.bf16.msra.mxu0 0
  %164 = vmatprep.subr.bf16.mxu0 0
  %165 = vmatpush1.bf16.msra.mxu0 0
  %166 = vmatprep.subr.bf16.mxu0 0
  %167 = vmatpush1.bf16.msra.mxu0 0
  %168 = vmatprep.subr.bf16.mxu0 0
  %169 = vmatpush1.bf16.msra.mxu0 0
  %170 = vmatprep.subr.bf16.mxu0 0
  %171 = vmatpush1.bf16.msra.mxu0 %v154
  %172 = vmatprep.subr.bf16.mxu0 0
  %173 = vmatpush2.bf16.msra.mxu0 0
  %174 = vmatprep.subr.bf16.mxu0 0
  %175 = vmatpush2.bf16.msra.mxu0 0
  %176 = vmatprep.subr.bf16.mxu0 0
  %177 = vmatpush2.bf16.msra.mxu0 0
  %178 = vmatprep.subr.bf16.mxu0 0
  %179 = vmatpush2.bf16.msra.mxu0 0
  %180 = vmatprep.subr.bf16.mxu0 0
  %181 = vmatpush2.bf16.msra.mxu0 0
  %182 = vmatprep.subr.bf16.mxu0 0
  %183 = vmatpush2.bf16.msra.mxu0 0
  %184 = vmatprep.subr.bf16.mxu0 0
  %185 = vmatpush2.bf16.msra.mxu0 0
  %186 = vmatprep.subr.bf16.mxu0 0
  %187 = vmatpush2.bf16.msra.mxu0 0
  %188 = vmatprep.mubr.bf16.mxu0 0
  %189 = vmatmul.mubr.bf16.gmra.mxu0 %v151
  %v190 = vpop.f32.mrf.mxu0
  %v191 = vadd.f32 0.0, %v190
  %v192 = vpop.f32.mrf.mxu0
  %v193 = vpop.f32.mrf.mxu0
  %v194 = vadd.f32 0.0, %v193
  %v195 = vpop.f32.mrf.mxu0
  %196 = vdwg.mxu0
  %v197 = vadd.f32 %v123, %v191
  %v198 = vadd.f32 %v124, %v194
  %199 = vst.msk [vmem:[#allocation2] sm:$0xff] %vm18, %v197
  %200 = vst.msk [vmem:[#allocation2 + $0x8] sm:$0xf] %vm20, %v198
  %v201 = vld [vmem:[%s0] sm:$0x1]
  %v202 = vld [vmem:[%s2] sm:$0x2]
  %v204 = vpack.i.b16 %v202, %v202
  %v206 = vlaneseq
  %v207 = vshrl.u32 %v206, 7
  %v208 = vsub.s32 1, %v207
  %v209 = vrot.slane %v204, %v208
  %v212 = vunpack.c.l.s4 1966171168
  %v213 = vunpack.c.0.s8 %v212
  %v214 = vlaneseq
  %v215 = vshrl.u32 %v214, 7
  %v216 = vsub.s32 %v213, %v215
  %v217 = vrot.slane %v209, %v216
  %v219 = vunpack.c.l.s4 1966171168
  %v220 = vunpack.c.0.s8 %v219
  %v221 = vlaneseq
  %v222 = vshrl.u32 %v221, 7
  %v223 = vsub.s32 %v220, %v222
  %v224 = vrot.slane %v217, %v223
  %225 = vrot.lane.b32.xlu0 %v224, 2
  %v226 = vpop.permute.xlu0 %225
  %v228 = vmul.bf16 %v201, %v226
  %v229 = vld [vmem:[#allocation2] sm:$0xff]
  %v230 = vld [vmem:[#allocation2 + $0x8] sm:$0xf]
  %s231 = scalar_lea.vmem %s1, 16
  %v232 = vld [vmem:[%s231] sm:$0xf]
  %v233 = vld [vmem:[%s231 + $0x4] sm:$0x3]
  %v236 = vunpack.c.l.b16 %v232
  %v237 = vunpack.c.l.b16 %v233
  %v238 = vpack.c.b16 %v237, %v236
  %v241 = vunpack.c.l.s4 1966171168
  %v242 = vunpack.c.0.s8 %v241
  %v243 = vlaneseq
  %v244 = vshrl.u32 %v243, 7
  %v245 = vsub.s32 %v242, %v244
  %v246 = vrot.slane %v228, %v245
  %v248 = vunpack.c.l.s4 1966171168
  %v249 = vunpack.c.0.s8 %v248
  %v250 = vlaneseq
  %v251 = vshrl.u32 %v250, 7
  %v252 = vsub.s32 %v249, %v251
  %v253 = vrot.slane %v246, %v252
  %254 = vrot.lane.b32.xlu0 %v253, 126
  %v255 = vpop.permute.xlu0 %254
  %v257 = vsel %vm41, %v238, 0
  %v260 = vsel %vm45, %v255, 0
  %262 = vmatprep.subr.bf16.mxu0 0
  %263 = vmatpush1.bf16.msra.mxu0 0
  %264 = vmatprep.subr.bf16.mxu0 0
  %265 = vmatpush1.bf16.msra.mxu0 0
  %266 = vmatprep.subr.bf16.mxu0 0
  %267 = vmatpush1.bf16.msra.mxu0 0
  %268 = vmatprep.subr.bf16.mxu0 0
  %269 = vmatpush1.bf16.msra.mxu0 0
  %270 = vmatprep.subr.bf16.mxu0 0
  %271 = vmatpush1.bf16.msra.mxu0 0
  %272 = vmatprep.subr.bf16.mxu0 0
  %273 = vmatpush1.bf16.msra.mxu0 0
  %274 = vmatprep.subr.bf16.mxu0 0
  %275 = vmatpush1.bf16.msra.mxu0 0
  %276 = vmatprep.subr.bf16.mxu0 0
  %277 = vmatpush1.bf16.msra.mxu0 %v260
  %278 = vmatprep.subr.bf16.mxu0 0
  %279 = vmatpush2.bf16.msra.mxu0 0
  %280 = vmatprep.subr.bf16.mxu0 0
  %281 = vmatpush2.bf16.msra.mxu0 0
  %282 = vmatprep.subr.bf16.mxu0 0
  %283 = vmatpush2.bf16.msra.mxu0 0
  %284 = vmatprep.subr.bf16.mxu0 0
  %285 = vmatpush2.bf16.msra.mxu0 0
  %286 = vmatprep.subr.bf16.mxu0 0
  %287 = vmatpush2.bf16.msra.mxu0 0
  %288 = vmatprep.subr.bf16.mxu0 0
  %289 = vmatpush2.bf16.msra.mxu0 0
  %290 = vmatprep.subr.bf16.mxu0 0
  %291 = vmatpush2.bf16.msra.mxu0 0
  %292 = vmatprep.subr.bf16.mxu0 0
  %293 = vmatpush2.bf16.msra.mxu0 0
  %294 = vmatprep.mubr.bf16.mxu0 0
  %295 = vmatmul.mubr.bf16.gmra.mxu0 %v257
  %v296 = vpop.f32.mrf.mxu0
  %v297 = vadd.f32 0.0, %v296
  %v298 = vpop.f32.mrf.mxu0
  %v299 = vpop.f32.mrf.mxu0
  %v300 = vadd.f32 0.0, %v299
  %v301 = vpop.f32.mrf.mxu0
  %302 = vdwg.mxu0
  %v303 = vadd.f32 %v229, %v297
  %v304 = vadd.f32 %v230, %v300
  %305 = vst.msk [vmem:[#allocation2] sm:$0xff] %vm18, %v303
  %306 = vst.msk [vmem:[#allocation2 + $0x8] sm:$0xf] %vm20, %v304
  %v307 = vld [vmem:[%s0] sm:$0x1]
  %v308 = vld [vmem:[%s2] sm:$0x2]
  %v310 = vshrl.u32 %v308, 16
  %v311 = vpack.i.b16 %v310, %v310
  %v313 = vlaneseq
  %v314 = vshrl.u32 %v313, 7
  %v315 = vsub.s32 1, %v314
  %v316 = vrot.slane %v311, %v315
  %v319 = vunpack.c.l.s4 1966171168
  %v320 = vunpack.c.0.s8 %v319
  %v321 = vlaneseq
  %v322 = vshrl.u32 %v321, 7
  %v323 = vsub.s32 %v320, %v322
  %v324 = vrot.slane %v316, %v323
  %v326 = vunpack.c.l.s4 1966171168
  %v327 = vunpack.c.0.s8 %v326
  %v328 = vlaneseq
  %v329 = vshrl.u32 %v328, 7
  %v330 = vsub.s32 %v327, %v329
  %v331 = vrot.slane %v324, %v330
  %332 = vrot.lane.b32.xlu0 %v331, 4
  %v333 = vpop.permute.xlu0 %332
  %v335 = vmul.bf16 %v307, %v333
  %v336 = vld [vmem:[#allocation2] sm:$0xff]
  %v337 = vld [vmem:[#allocation2 + $0x8] sm:$0xf]
  %s338 = scalar_lea.vmem %s1, 24
  %v339 = vld [vmem:[%s338] sm:$0xf]
  %v340 = vld [vmem:[%s338 + $0x4] sm:$0x3]
  %v343 = vunpack.c.l.b16 %v339
  %v344 = vunpack.c.l.b16 %v340
  %v345 = vpack.c.b16 %v344, %v343
  %v348 = vunpack.c.l.s4 1966171168
  %v349 = vunpack.c.0.s8 %v348
  %v350 = vlaneseq
  %v351 = vshrl.u32 %v350, 7
  %v352 = vsub.s32 %v349, %v351
  %v353 = vrot.slane %v335, %v352
  %v355 = vunpack.c.l.s4 1966171168
  %v356 = vunpack.c.0.s8 %v355
  %v357 = vlaneseq
  %v358 = vshrl.u32 %v357, 7
  %v359 = vsub.s32 %v356, %v358
  %v360 = vrot.slane %v353, %v359
  %361 = vrot.lane.b32.xlu0 %v360, 124
  %v362 = vpop.permute.xlu0 %361
  %v364 = vsel %vm41, %v345, 0
  %v367 = vsel %vm45, %v362, 0
  %369 = vmatprep.subr.bf16.mxu0 0
  %370 = vmatpush1.bf16.msra.mxu0 0
  %371 = vmatprep.subr.bf16.mxu0 0
  %372 = vmatpush1.bf16.msra.mxu0 0
  %373 = vmatprep.subr.bf16.mxu0 0
  %374 = vmatpush1.bf16.msra.mxu0 0
  %375 = vmatprep.subr.bf16.mxu0 0
  %376 = vmatpush1.bf16.msra.mxu0 0
  %377 = vmatprep.subr.bf16.mxu0 0
  %378 = vmatpush1.bf16.msra.mxu0 0
  %379 = vmatprep.subr.bf16.mxu0 0
  %380 = vmatpush1.bf16.msra.mxu0 0
  %381 = vmatprep.subr.bf16.mxu0 0
  %382 = vmatpush1.bf16.msra.mxu0 0
  %383 = vmatprep.subr.bf16.mxu0 0
  %384 = vmatpush1.bf16.msra.mxu0 %v367
  %385 = vmatprep.subr.bf16.mxu0 0
  %386 = vmatpush2.bf16.msra.mxu0 0
  %387 = vmatprep.subr.bf16.mxu0 0
  %388 = vmatpush2.bf16.msra.mxu0 0
  %389 = vmatprep.subr.bf16.mxu0 0
  %390 = vmatpush2.bf16.msra.mxu0 0
  %391 = vmatprep.subr.bf16.mxu0 0
  %392 = vmatpush2.bf16.msra.mxu0 0
  %393 = vmatprep.subr.bf16.mxu0 0
  %394 = vmatpush2.bf16.msra.mxu0 0
  %395 = vmatprep.subr.bf16.mxu0 0
  %396 = vmatpush2.bf16.msra.mxu0 0
  %397 = vmatprep.subr.bf16.mxu0 0
  %398 = vmatpush2.bf16.msra.mxu0 0
  %399 = vmatprep.subr.bf16.mxu0 0
  %400 = vmatpush2.bf16.msra.mxu0 0
  %401 = vmatprep.mubr.bf16.mxu0 0
  %402 = vmatmul.mubr.bf16.gmra.mxu0 %v364
  %v403 = vpop.f32.mrf.mxu0
  %v404 = vadd.f32 0.0, %v403
  %v405 = vpop.f32.mrf.mxu0
  %v406 = vpop.f32.mrf.mxu0
  %v407 = vadd.f32 0.0, %v406
  %v408 = vpop.f32.mrf.mxu0
  %409 = vdwg.mxu0
  %v410 = vadd.f32 %v336, %v404
  %v411 = vadd.f32 %v337, %v407
  %412 = vst.msk [vmem:[#allocation2] sm:$0xff] %vm18, %v410
  %413 = vst.msk [vmem:[#allocation2 + $0x8] sm:$0xf] %vm20, %v411
  %v414 = vld [vmem:[%s0] sm:$0x1]
  %v415 = vld [vmem:[#allocation2] sm:$0xff]
  %v416 = vld [vmem:[#allocation2 + $0x8] sm:$0xf]
  %s417 = scalar_lea.vmem %s1, 32
  %v418 = vld [vmem:[%s417] sm:$0xf]
  %v419 = vld [vmem:[%s417 + $0x4] sm:$0x3]
  %v422 = vunpack.c.l.b16 %v418
  %v423 = vunpack.c.l.b16 %v419
  %v424 = vpack.c.b16 %v423, %v422
  %v427 = vunpack.c.l.s4 1966171168
  %v428 = vunpack.c.0.s8 %v427
  %v429 = vlaneseq
  %v430 = vshrl.u32 %v429, 7
  %v431 = vsub.s32 %v428, %v430
  %v432 = vrot.slane %v414, %v431
  %v434 = vunpack.c.l.s4 1966171168
  %v435 = vunpack.c.0.s8 %v434
  %v436 = vlaneseq
  %v437 = vshrl.u32 %v436, 7
  %v438 = vsub.s32 %v435, %v437
  %v439 = vrot.slane %v432, %v438
  %440 = vrot.lane.b32.xlu0 %v439, 123
  %v441 = vpop.permute.xlu0 %440
  %v443 = vsel %vm41, %v424, 0
  %v446 = vsel %vm45, %v441, 0
  %448 = vmatprep.subr.bf16.mxu0 0
  %449 = vmatpush1.bf16.msra.mxu0 0
  %450 = vmatprep.subr.bf16.mxu0 0
  %451 = vmatpush1.bf16.msra.mxu0 0
  %452 = vmatprep.subr.bf16.mxu0 0
  %453 = vmatpush1.bf16.msra.mxu0 0
  %454 = vmatprep.subr.bf16.mxu0 0
  %455 = vmatpush1.bf16.msra.mxu0 0
  %456 = vmatprep.subr.bf16.mxu0 0
  %457 = vmatpush1.bf16.msra.mxu0 0
  %458 = vmatprep.subr.bf16.mxu0 0
  %459 = vmatpush1.bf16.msra.mxu0 0
  %460 = vmatprep.subr.bf16.mxu0 0
  %461 = vmatpush1.bf16.msra.mxu0 0
  %462 = vmatprep.subr.bf16.mxu0 0
  %463 = vmatpush1.bf16.msra.mxu0 %v446
  %464 = vmatprep.subr.bf16.mxu0 0
  %465 = vmatpush2.bf16.msra.mxu0 0
  %466 = vmatprep.subr.bf16.mxu0 0
  %467 = vmatpush2.bf16.msra.mxu0 0
  %468 = vmatprep.subr.bf16.mxu0 0
  %469 = vmatpush2.bf16.msra.mxu0 0
  %470 = vmatprep.subr.bf16.mxu0 0
  %471 = vmatpush2.bf16.msra.mxu0 0
  %472 = vmatprep.subr.bf16.mxu0 0
  %473 = vmatpush2.bf16.msra.mxu0 0
  %474 = vmatprep.subr.bf16.mxu0 0
  %475 = vmatpush2.bf16.msra.mxu0 0
  %476 = vmatprep.subr.bf16.mxu0 0
  %477 = vmatpush2.bf16.msra.mxu0 0
  %478 = vmatprep.subr.bf16.mxu0 0
  %479 = vmatpush2.bf16.msra.mxu0 0
  %480 = vmatprep.mubr.bf16.mxu0 0
  %481 = vmatmul.mubr.bf16.gmra.mxu0 %v443
  %v482 = vpop.f32.mrf.mxu0
  %v483 = vadd.f32 0.0, %v482
  %v484 = vpop.f32.mrf.mxu0
  %v485 = vpop.f32.mrf.mxu0
  %v486 = vadd.f32 0.0, %v485
  %v487 = vpop.f32.mrf.mxu0
  %488 = vdwg.mxu0
  %v489 = vadd.f32 %v415, %v483
  %v490 = vadd.f32 %v416, %v486
  %491 = vst.msk [vmem:[#allocation2] sm:$0xff] %vm18, %v489
  %492 = vst.msk [vmem:[#allocation2 + $0x8] sm:$0xf] %vm20, %v490
  %v493 = vld [vmem:[%s0] sm:$0x1]
  %v494 = vld [vmem:[%s2] sm:$0x4]
  %v496 = vshrl.u32 %v494, 16
  %v497 = vpack.i.b16 %v496, %v496
  %v499 = vlaneseq
  %v500 = vshrl.u32 %v499, 7
  %v501 = vsub.s32 2, %v500
  %v502 = vrot.slane %v497, %v501
  %v505 = vunpack.c.l.s4 1966171168
  %v506 = vunpack.c.0.s8 %v505
  %v507 = vlaneseq
  %v508 = vshrl.u32 %v507, 7
  %v509 = vsub.s32 %v506, %v508
  %v510 = vrot.slane %v502, %v509
  %v512 = vunpack.c.l.s4 1966171168
  %v513 = vunpack.c.0.s8 %v512
  %v514 = vlaneseq
  %v515 = vshrl.u32 %v514, 7
  %v516 = vsub.s32 %v513, %v515
  %v517 = vrot.slane %v510, %v516
  %518 = vrot.lane.b32.xlu0 %v517, 6
  %v519 = vpop.permute.xlu0 %518
  %v521 = vmul.bf16 %v493, %v519
  %v522 = vld [vmem:[#allocation2] sm:$0xff]
  %v523 = vld [vmem:[#allocation2 + $0x8] sm:$0xf]
  %s524 = scalar_lea.vmem %s1, 40
  %v525 = vld [vmem:[%s524] sm:$0xf]
  %v526 = vld [vmem:[%s524 + $0x4] sm:$0x3]
  %v529 = vunpack.c.l.b16 %v525
  %v530 = vunpack.c.l.b16 %v526
  %v531 = vpack.c.b16 %v530, %v529
  %v534 = vunpack.c.l.s4 1966171168
  %v535 = vunpack.c.0.s8 %v534
  %v536 = vlaneseq
  %v537 = vshrl.u32 %v536, 7
  %v538 = vsub.s32 %v535, %v537
  %v539 = vrot.slane %v521, %v538
  %v541 = vunpack.c.l.s4 1966171168
  %v542 = vunpack.c.0.s8 %v541
  %v543 = vlaneseq
  %v544 = vshrl.u32 %v543, 7
  %v545 = vsub.s32 %v542, %v544
  %v546 = vrot.slane %v539, %v545
  %547 = vrot.lane.b32.xlu0 %v546, 122
  %v548 = vpop.permute.xlu0 %547
  %v550 = vsel %vm41, %v531, 0
  %v553 = vsel %vm45, %v548, 0
  %555 = vmatprep.subr.bf16.mxu0 0
  %556 = vmatpush1.bf16.msra.mxu0 0
  %557 = vmatprep.subr.bf16.mxu0 0
  %558 = vmatpush1.bf16.msra.mxu0 0
  %559 = vmatprep.subr.bf16.mxu0 0
  %560 = vmatpush1.bf16.msra.mxu0 0
  %561 = vmatprep.subr.bf16.mxu0 0
  %562 = vmatpush1.bf16.msra.mxu0 0
  %563 = vmatprep.subr.bf16.mxu0 0
  %564 = vmatpush1.bf16.msra.mxu0 0
  %565 = vmatprep.subr.bf16.mxu0 0
  %566 = vmatpush1.bf16.msra.mxu0 0
  %567 = vmatprep.subr.bf16.mxu0 0
  %568 = vmatpush1.bf16.msra.mxu0 0
  %569 = vmatprep.subr.bf16.mxu0 0
  %570 = vmatpush1.bf16.msra.mxu0 %v553
  %571 = vmatprep.subr.bf16.mxu0 0
  %572 = vmatpush2.bf16.msra.mxu0 0
  %573 = vmatprep.subr.bf16.mxu0 0
  %574 = vmatpush2.bf16.msra.mxu0 0
  %575 = vmatprep.subr.bf16.mxu0 0
  %576 = vmatpush2.bf16.msra.mxu0 0
  %577 = vmatprep.subr.bf16.mxu0 0
  %578 = vmatpush2.bf16.msra.mxu0 0
  %579 = vmatprep.subr.bf16.mxu0 0
  %580 = vmatpush2.bf16.msra.mxu0 0
  %581 = vmatprep.subr.bf16.mxu0 0
  %582 = vmatpush2.bf16.msra.mxu0 0
  %583 = vmatprep.subr.bf16.mxu0 0
  %584 = vmatpush2.bf16.msra.mxu0 0
  %585 = vmatprep.subr.bf16.mxu0 0
  %586 = vmatpush2.bf16.msra.mxu0 0
  %587 = vmatprep.mubr.bf16.mxu0 0
  %588 = vmatmul.mubr.bf16.gmra.mxu0 %v550
  %v589 = vpop.f32.mrf.mxu0
  %v590 = vadd.f32 0.0, %v589
  %v591 = vpop.f32.mrf.mxu0
  %v592 = vpop.f32.mrf.mxu0
  %v593 = vadd.f32 0.0, %v592
  %v594 = vpop.f32.mrf.mxu0
  %595 = vdwg.mxu0
  %v596 = vadd.f32 %v522, %v590
  %v597 = vadd.f32 %v523, %v593
  %598 = vst.msk [vmem:[#allocation2] sm:$0xff] %vm18, %v596
  %599 = vst.msk [vmem:[#allocation2 + $0x8] sm:$0xf] %vm20, %v597
  %v600 = vld [vmem:[%s0] sm:$0x1]
  %v601 = vld [vmem:[%s2] sm:$0x8]
  %v603 = vpack.i.b16 %v601, %v601
  %v605 = vlaneseq
  %v606 = vshrl.u32 %v605, 7
  %v607 = vsub.s32 3, %v606
  %v608 = vrot.slane %v603, %v607
  %v611 = vunpack.c.l.s4 1966171168
  %v612 = vunpack.c.0.s8 %v611
  %v613 = vlaneseq
  %v614 = vshrl.u32 %v613, 7
  %v615 = vsub.s32 %v612, %v614
  %v616 = vrot.slane %v608, %v615
  %v618 = vunpack.c.l.s4 1966171168
  %v619 = vunpack.c.0.s8 %v618
  %v620 = vlaneseq
  %v621 = vshrl.u32 %v620, 7
  %v622 = vsub.s32 %v619, %v621
  %v623 = vrot.slane %v616, %v622
  %624 = vrot.lane.b32.xlu0 %v623, 8
  %v625 = vpop.permute.xlu0 %624
  %v627 = vmul.bf16 %v600, %v625
  %v628 = vld [vmem:[#allocation2] sm:$0xff]
  %v629 = vld [vmem:[#allocation2 + $0x8] sm:$0xf]
  %s630 = scalar_lea.vmem %s1, 48
  %v631 = vld [vmem:[%s630] sm:$0xf]
  %v632 = vld [vmem:[%s630 + $0x4] sm:$0x3]
  %v635 = vunpack.c.l.b16 %v631
  %v636 = vunpack.c.l.b16 %v632
  %v637 = vpack.c.b16 %v636, %v635
  %v640 = vunpack.c.l.s4 1966171168
  %v641 = vunpack.c.0.s8 %v640
  %v642 = vlaneseq
  %v643 = vshrl.u32 %v642, 7
  %v644 = vsub.s32 %v641, %v643
  %v645 = vrot.slane %v627, %v644
  %v647 = vunpack.c.l.s4 1966171168
  %v648 = vunpack.c.0.s8 %v647
  %v649 = vlaneseq
  %v650 = vshrl.u32 %v649, 7
  %v651 = vsub.s32 %v648, %v650
  %v652 = vrot.slane %v645, %v651
  %653 = vrot.lane.b32.xlu0 %v652, 120
  %v654 = vpop.permute.xlu0 %653
  %v656 = vsel %vm41, %v637, 0
  %v659 = vsel %vm45, %v654, 0
  %661 = vmatprep.subr.bf16.mxu0 0
  %662 = vmatpush1.bf16.msra.mxu0 0
  %663 = vmatprep.subr.bf16.mxu0 0
  %664 = vmatpush1.bf16.msra.mxu0 0
  %665 = vmatprep.subr.bf16.mxu0 0
  %666 = vmatpush1.bf16.msra.mxu0 0
  %667 = vmatprep.subr.bf16.mxu0 0
  %668 = vmatpush1.bf16.msra.mxu0 0
  %669 = vmatprep.subr.bf16.mxu0 0
  %670 = vmatpush1.bf16.msra.mxu0 0
  %671 = vmatprep.subr.bf16.mxu0 0
  %672 = vmatpush1.bf16.msra.mxu0 0
  %673 = vmatprep.subr.bf16.mxu0 0
  %674 = vmatpush1.bf16.msra.mxu0 0
  %675 = vmatprep.subr.bf16.mxu0 0
  %676 = vmatpush1.bf16.msra.mxu0 %v659
  %677 = vmatprep.subr.bf16.mxu0 0
  %678 = vmatpush2.bf16.msra.mxu0 0
  %679 = vmatprep.subr.bf16.mxu0 0
  %680 = vmatpush2.bf16.msra.mxu0 0
  %681 = vmatprep.subr.bf16.mxu0 0
  %682 = vmatpush2.bf16.msra.mxu0 0
  %683 = vmatprep.subr.bf16.mxu0 0
  %684 = vmatpush2.bf16.msra.mxu0 0
  %685 = vmatprep.subr.bf16.mxu0 0
  %686 = vmatpush2.bf16.msra.mxu0 0
  %687 = vmatprep.subr.bf16.mxu0 0
  %688 = vmatpush2.bf16.msra.mxu0 0
  %689 = vmatprep.subr.bf16.mxu0 0
  %690 = vmatpush2.bf16.msra.mxu0 0
  %691 = vmatprep.subr.bf16.mxu0 0
  %692 = vmatpush2.bf16.msra.mxu0 0
  %693 = vmatprep.mubr.bf16.mxu0 0
  %694 = vmatmul.mubr.bf16.gmra.mxu0 %v656
  %v695 = vpop.f32.mrf.mxu0
  %v696 = vadd.f32 0.0, %v695
  %v697 = vpop.f32.mrf.mxu0
  %v698 = vpop.f32.mrf.mxu0
  %v699 = vadd.f32 0.0, %v698
  %v700 = vpop.f32.mrf.mxu0
  %701 = vdwg.mxu0
  %v702 = vadd.f32 %v628, %v696
  %v703 = vadd.f32 %v629, %v699
  %704 = vst.msk [vmem:[#allocation2] sm:$0xff] %vm18, %v702
  %705 = vst.msk [vmem:[#allocation2 + $0x8] sm:$0xf] %vm20, %v703
  %v706 = vld [vmem:[%s0] sm:$0x1]
  %v707 = vld [vmem:[%s2] sm:$0x8]
  %v709 = vshrl.u32 %v707, 16
  %v710 = vpack.i.b16 %v709, %v709
  %v712 = vlaneseq
  %v713 = vshrl.u32 %v712, 7
  %v714 = vsub.s32 3, %v713
  %v715 = vrot.slane %v710, %v714
  %v718 = vunpack.c.l.s4 1966171168
  %v719 = vunpack.c.0.s8 %v718
  %v720 = vlaneseq
  %v721 = vshrl.u32 %v720, 7
  %v722 = vsub.s32 %v719, %v721
  %v723 = vrot.slane %v715, %v722
  %v725 = vunpack.c.l.s4 1966171168
  %v726 = vunpack.c.0.s8 %v725
  %v727 = vlaneseq
  %v728 = vshrl.u32 %v727, 7
  %v729 = vsub.s32 %v726, %v728
  %v730 = vrot.slane %v723, %v729
  %731 = vrot.lane.b32.xlu0 %v730, 9
  %v732 = vpop.permute.xlu0 %731
  %v734 = vmul.bf16 %v706, %v732
  %v735 = vld [vmem:[#allocation2] sm:$0xff]
  %v736 = vld [vmem:[#allocation2 + $0x8] sm:$0xf]
  %s737 = scalar_lea.vmem %s1, 56
  %v738 = vld [vmem:[%s737] sm:$0xf]
  %v739 = vld [vmem:[%s737 + $0x4] sm:$0x3]
  %v742 = vunpack.c.l.b16 %v738
  %v743 = vunpack.c.l.b16 %v739
  %v744 = vpack.c.b16 %v743, %v742
  %v747 = vunpack.c.l.s4 1966171168
  %v748 = vunpack.c.0.s8 %v747
  %v749 = vlaneseq
  %v750 = vshrl.u32 %v749, 7
  %v751 = vsub.s32 %v748, %v750
  %v752 = vrot.slane %v734, %v751
  %v754 = vunpack.c.l.s4 1966171168
  %v755 = vunpack.c.0.s8 %v754
  %v756 = vlaneseq
  %v757 = vshrl.u32 %v756, 7
  %v758 = vsub.s32 %v755, %v757
  %v759 = vrot.slane %v752, %v758
  %760 = vrot.lane.b32.xlu0 %v759, 119
  %v761 = vpop.permute.xlu0 %760
  %v763 = vsel %vm41, %v744, 0
  %v766 = vsel %vm45, %v761, 0
  %768 = vmatprep.subr.bf16.mxu0 0
  %769 = vmatpush1.bf16.msra.mxu0 0
  %770 = vmatprep.subr.bf16.mxu0 0
  %771 = vmatpush1.bf16.msra.mxu0 0
  %772 = vmatprep.subr.bf16.mxu0 0
  %773 = vmatpush1.bf16.msra.mxu0 0
  %774 = vmatprep.subr.bf16.mxu0 0
  %775 = vmatpush1.bf16.msra.mxu0 0
  %776 = vmatprep.subr.bf16.mxu0 0
  %777 = vmatpush1.bf16.msra.mxu0 0
  %778 = vmatprep.subr.bf16.mxu0 0
  %779 = vmatpush1.bf16.msra.mxu0 0
  %780 = vmatprep.subr.bf16.mxu0 0
  %781 = vmatpush1.bf16.msra.mxu0 0
  %782 = vmatprep.subr.bf16.mxu0 0
  %783 = vmatpush1.bf16.msra.mxu0 %v766
  %784 = vmatprep.subr.bf16.mxu0 0
  %785 = vmatpush2.bf16.msra.mxu0 0
  %786 = vmatprep.subr.bf16.mxu0 0
  %787 = vmatpush2.bf16.msra.mxu0 0
  %788 = vmatprep.subr.bf16.mxu0 0
  %789 = vmatpush2.bf16.msra.mxu0 0
  %790 = vmatprep.subr.bf16.mxu0 0
  %791 = vmatpush2.bf16.msra.mxu0 0
  %792 = vmatprep.subr.bf16.mxu0 0
  %793 = vmatpush2.bf16.msra.mxu0 0
  %794 = vmatprep.subr.bf16.mxu0 0
  %795 = vmatpush2.bf16.msra.mxu0 0
  %796 = vmatprep.subr.bf16.mxu0 0
  %797 = vmatpush2.bf16.msra.mxu0 0
  %798 = vmatprep.subr.bf16.mxu0 0
  %799 = vmatpush2.bf16.msra.mxu0 0
  %800 = vmatprep.mubr.bf16.mxu0 0
  %801 = vmatmul.mubr.bf16.gmra.mxu0 %v763
  %v802 = vpop.f32.mrf.mxu0
  %v803 = vadd.f32 0.0, %v802
  %v804 = vpop.f32.mrf.mxu0
  %v805 = vpop.f32.mrf.mxu0
  %v806 = vadd.f32 0.0, %v805
  %v807 = vpop.f32.mrf.mxu0
  %808 = vdwg.mxu0
  %v809 = vadd.f32 %v735, %v803
  %v810 = vadd.f32 %v736, %v806
  %811 = vst.msk [vmem:[#allocation2] sm:$0xff] %vm18, %v809
  %812 = vst.msk [vmem:[#allocation2 + $0x8] sm:$0xf] %vm20, %v810
  %v813 = vld [vmem:[%s0] sm:$0x1]
  %v814 = vld [vmem:[%s2 + $0x4] sm:$0x1]
  %v816 = vpack.i.b16 %v814, %v814
  %v818 = vlaneseq
  %v819 = vshrl.u32 %v818, 7
  %v820 = vsub.s32 0, %v819
  %v821 = vrot.slane %v816, %v820
  %v824 = vunpack.c.l.s4 1966171168
  %v825 = vunpack.c.0.s8 %v824
  %v826 = vlaneseq
  %v827 = vshrl.u32 %v826, 7
  %v828 = vsub.s32 %v825, %v827
  %v829 = vrot.slane %v821, %v828
  %v831 = vunpack.c.l.s4 1966171168
  %v832 = vunpack.c.0.s8 %v831
  %v833 = vlaneseq
  %v834 = vshrl.u32 %v833, 7
  %v835 = vsub.s32 %v832, %v834
  %v836 = vrot.slane %v829, %v835
  %837 = vrot.lane.b32.xlu0 %v836, 10
  %v838 = vpop.permute.xlu0 %837
  %v840 = vmul.bf16 %v813, %v838
  %v841 = vld [vmem:[#allocation2] sm:$0xff]
  %v842 = vld [vmem:[#allocation2 + $0x8] sm:$0xf]
  %s843 = scalar_lea.vmem %s1, 64
  %v844 = vld [vmem:[%s843] sm:$0xf]
  %v845 = vld [vmem:[%s843 + $0x4] sm:$0x3]
  %v848 = vunpack.c.l.b16 %v844
  %v849 = vunpack.c.l.b16 %v845
  %v850 = vpack.c.b16 %v849, %v848
  %v853 = vunpack.c.l.s4 1966171168
  %v854 = vunpack.c.0.s8 %v853
  %v855 = vlaneseq
  %v856 = vshrl.u32 %v855, 7
  %v857 = vsub.s32 %v854, %v856
  %v858 = vrot.slane %v840, %v857
  %v860 = vunpack.c.l.s4 1966171168
  %v861 = vunpack.c.0.s8 %v860
  %v862 = vlaneseq
  %v863 = vshrl.u32 %v862, 7
  %v864 = vsub.s32 %v861, %v863
  %v865 = vrot.slane %v858, %v864
  %866 = vrot.lane.b32.xlu0 %v865, 118
  %v867 = vpop.permute.xlu0 %866
  %v869 = vsel %vm41, %v850, 0
  %v872 = vsel %vm45, %v867, 0
  %874 = vmatprep.subr.bf16.mxu0 0
  %875 = vmatpush1.bf16.msra.mxu0 0
  %876 = vmatprep.subr.bf16.mxu0 0
  %877 = vmatpush1.bf16.msra.mxu0 0
  %878 = vmatprep.subr.bf16.mxu0 0
  %879 = vmatpush1.bf16.msra.mxu0 0
  %880 = vmatprep.subr.bf16.mxu0 0
  %881 = vmatpush1.bf16.msra.mxu0 0
  %882 = vmatprep.subr.bf16.mxu0 0
  %883 = vmatpush1.bf16.msra.mxu0 0
  %884 = vmatprep.subr.bf16.mxu0 0
  %885 = vmatpush1.bf16.msra.mxu0 0
  %886 = vmatprep.subr.bf16.mxu0 0
  %887 = vmatpush1.bf16.msra.mxu0 0
  %888 = vmatprep.subr.bf16.mxu0 0
  %889 = vmatpush1.bf16.msra.mxu0 %v872
  %890 = vmatprep.subr.bf16.mxu0 0
  %891 = vmatpush2.bf16.msra.mxu0 0
  %892 = vmatprep.subr.bf16.mxu0 0
  %893 = vmatpush2.bf16.msra.mxu0 0
  %894 = vmatprep.subr.bf16.mxu0 0
  %895 = vmatpush2.bf16.msra.mxu0 0
  %896 = vmatprep.subr.bf16.mxu0 0
  %897 = vmatpush2.bf16.msra.mxu0 0
  %898 = vmatprep.subr.bf16.mxu0 0
  %899 = vmatpush2.bf16.msra.mxu0 0
  %900 = vmatprep.subr.bf16.mxu0 0
  %901 = vmatpush2.bf16.msra.mxu0 0
  %902 = vmatprep.subr.bf16.mxu0 0
  %903 = vmatpush2.bf16.msra.mxu0 0
  %904 = vmatprep.subr.bf16.mxu0 0
  %905 = vmatpush2.bf16.msra.mxu0 0
  %906 = vmatprep.mubr.bf16.mxu0 0
  %907 = vmatmul.mubr.bf16.gmra.mxu0 %v869
  %v908 = vpop.f32.mrf.mxu0
  %v909 = vadd.f32 0.0, %v908
  %v910 = vpop.f32.mrf.mxu0
  %v911 = vpop.f32.mrf.mxu0
  %v912 = vadd.f32 0.0, %v911
  %v913 = vpop.f32.mrf.mxu0
  %914 = vdwg.mxu0
  %v915 = vadd.f32 %v841, %v909
  %v916 = vadd.f32 %v842, %v912
  %917 = vst.msk [vmem:[#allocation2] sm:$0xff] %vm18, %v915
  %918 = vst.msk [vmem:[#allocation2 + $0x8] sm:$0xf] %vm20, %v916
  %v919 = vld [vmem:[#allocation2] sm:$0xff]
  %v920 = vld [vmem:[#allocation2 + $0x8] sm:$0xf]
  %v921 = vld [vmem:[%s3] sm:$0xff]
  %v922 = vld [vmem:[%s3 + $0x8] sm:$0xf]
  %924 = vset.pattern.permute.xlu0 0
  %925 = vperm.xlu0 %924, %v921
  %v926 = vpop.permute.xlu0 %925
  %929 = vset.pattern.permute.xlu0 0
  %930 = vperm.xlu0 %929, %v922
  %v931 = vpop.permute.xlu0 %930
  %v933 = vadd.f32 %v919, %v926
  %v934 = vadd.f32 %v920, %v931
  %935 = vst.msk [vmem:[%s4] sm:$0xff] %vm18, %v933
  %936 = vst.msk [vmem:[%s4 + $0x8] sm:$0xf] %vm20, %v934
  // Predicated region
  $region18: #{tpu_custom_call.1} parent=0 // pred_check
    _
  $region19: #{tpu_custom_call.1} parent=0 // pred_check_branch
    %938 = sbr.rel (0) target = $region21
  $region20: #{tpu_custom_call.1} parent=0 // pred_region
    _
  $region21: #{tpu_custom_call.1} parent=0 // pred_fallthru
    _
  // Predicated region
  $region22: #{tpu_custom_call.1} parent=0 // pred_check
    _
  $region23: #{tpu_custom_call.1} parent=0 // pred_check_branch
    %940 = sbr.rel (0) target = $region25
  $region24: #{tpu_custom_call.1} parent=0 // pred_region
    _
  $region25: #{tpu_custom_call.1} parent=0 // pred_fallthru
    _

</llo_original>
